<compile_context>
chip_gen: v6e
topology: v6e:2x2x1
jax: 0.10.0
libtpu: 0.0.40
codegen_flags: <defaults>
</compile_context>

<pallas_src>
import functools

import jax
import jax.numpy as jnp
from jax.experimental import pallas as pl
from jax.experimental.pallas import tpu as pltpu


def _round_up(x, m):
    return ((x + m - 1) // m) * m


def _vmem_capacity_bytes():
    """Per-core VMEM capacity; conservative 64 MiB (v7x) if query unavailable."""
    try:
        cap = int(pltpu.get_tpu_info().vmem_capacity_bytes)
        if cap > 0:
            return cap
    except Exception:
        pass
    return 64 * 1024 * 1024


# ---------------------------------------------------------------------------
# Fused whole-encoder kernel (weights resident in VMEM, grid over row tiles).
# ---------------------------------------------------------------------------
def _fused_encoder_kernel(*refs, n_layers):
    x_ref = refs[0]
    o_ref = refs[-1]
    h = x_ref[...]
    for l in range(n_layers):
        w_ref = refs[1 + 2 * l]
        b_ref = refs[2 + 2 * l]
        y = jnp.dot(h.astype(w_ref.dtype), w_ref[...],
                    preferred_element_type=jnp.float32)
        y = y + b_ref[...].astype(jnp.float32)
        if l != n_layers - 1:
            y = jnp.maximum(y, 0.0)          # ReLU between layers only
        h = y
    o_ref[...] = h.astype(o_ref.dtype)


# ---------------------------------------------------------------------------
# Fallback: per-layer tiled linear with K-axis reduction grid (large layers).
# ---------------------------------------------------------------------------
def _tiled_linear_kernel(x_ref, w_ref, b_ref, o_ref, acc_ref, *, apply_relu):
    @pl.when(pl.program_id(2) == 0)
    def _():
        acc_ref[...] = jnp.zeros_like(acc_ref)

    acc_ref[...] += jnp.dot(x_ref[...], w_ref[...],
                            preferred_element_type=jnp.float32)

    @pl.when(pl.program_id(2) == pl.num_programs(2) - 1)
    def _():
        y = acc_ref[...] + b_ref[...].astype(jnp.float32)
        if apply_relu:
            y = jnp.maximum(y, 0.0)
        o_ref[...] = y.astype(o_ref.dtype)


def _linear_tiled(x, w, b, *, apply_relu, vmem_cap):
    """y = x @ w + b with row/col/K tiling. w is K-major, out dim 128-padded."""
    N, K = x.shape
    out_pad = w.shape[1]
    out_dtype = x.dtype

    # Reduction axis must be exactly zero-padded (cannot rely on OOB garbage).
    tk = min(512, _round_up(K, 128))
    k_pad = _round_up(K, tk)
    if k_pad != K:
        x = jnp.pad(x, ((0, 0), (0, k_pad - K)))
        w = jnp.pad(w, ((0, k_pad - K), (0, 0)))
    tn = 512 if out_pad % 512 == 0 else (256 if out_pad % 256 == 0 else 128)
    tm = min(1024, _round_up(N, 8))

    grid = (pl.cdiv(N, tm), out_pad // tn, k_pad // tk)

    x_isz = jnp.dtype(x.dtype).itemsize
    w_isz = jnp.dtype(w.dtype).itemsize
    o_isz = jnp.dtype(out_dtype).itemsize
    tile_bytes = (2 * (tm * tk * x_isz + tk * tn * w_isz + 16 * tn * w_isz
                       + tm * tn * o_isz) + tm * tn * 4)
    vmem_limit = int(max(16 << 20, min(int(vmem_cap * 0.9),
                                       tile_bytes + (4 << 20))))

    kernel = functools.partial(_tiled_linear_kernel, apply_relu=apply_relu)
    return pl.pallas_call(
        kernel,
        out_shape=jax.ShapeDtypeStruct((N, out_pad), out_dtype),
        grid=grid,
        in_specs=[
            pl.BlockSpec((tm, tk), lambda i, j, k: (i, k)),   # x row/K tile
            pl.BlockSpec((tk, tn), lambda i, j, k: (k, j)),   # K-major weight
            pl.BlockSpec((1, tn), lambda i, j, k: (0, j)),    # bias tile
        ],
        out_specs=pl.BlockSpec((tm, tn), lambda i, j, k: (i, j)),
        scratch_shapes=[pltpu.VMEM((tm, tn), jnp.float32)],
        compiler_params=pltpu.CompilerParams(
            dimension_semantics=("parallel", "parallel", "arbitrary"),
            vmem_limit_bytes=vmem_limit,
        ),
    )(x, w, b)


# ---------------------------------------------------------------------------
# Parameter construction (relayout hoisted out of the forward path).
# ---------------------------------------------------------------------------
def set_dims_rwcl(feat_dim, enc_arch):
    dims = [(feat_dim, enc_arch[0])]
    dims += [(enc_arch[i], enc_arch[i + 1]) for i in range(len(enc_arch) - 1)]
    return dims


def init_rwcl_encoder_params(key, feat_dim, enc_arch, dtype=jnp.float32):
    """Raw PyTorch-layout params: list of (W (out,in), b (out,))."""
    params = []
    for d_in, d_out in set_dims_rwcl(feat_dim, enc_arch):
        key, sub = jax.random.split(key)
        bound = (6.0 / (d_in + d_out)) ** 0.5
        w = jax.random.uniform(sub, (d_out, d_in), dtype=dtype,
                               minval=-bound, maxval=bound)
        b = jnp.zeros((d_out,), dtype=dtype)
        params.append((w, b))
    return params


def pack_encoder_params(raw_params, compute_dtype=jnp.float32):
    """One-time relayout: K-major weights, 128-lane padded out dim, K dim padded
    to the previous layer's padded width (zero rows -> contribute 0), bias as
    (1, out_pad).  Done at init so forward does no transpose/pad copies."""
    packed = []
    prev_pad = None
    for (w, b) in raw_params:
        d_out, d_in = w.shape
        out_pad = _round_up(d_out, 128)
        w_t = jnp.pad(w.T.astype(compute_dtype), ((0, 0), (0, out_pad - d_out)))
        if prev_pad is not None and prev_pad != d_in:
            w_t = jnp.pad(w_t, ((0, prev_pad - d_in), (0, 0)))
        b_p = jnp.pad(b.astype(compute_dtype),
                      (0, out_pad - d_out)).reshape(1, out_pad)
        packed.append({"w": w_t, "b": b_p, "d_out": d_out})
        prev_pad = out_pad
    return packed


# ---------------------------------------------------------------------------
# Forward pass.
# ---------------------------------------------------------------------------
def _pick_row_tile(n_rows, tm_budget):
    n_rows8 = _round_up(max(int(n_rows), 1), 8)
    tm = max(8, min(int(tm_budget), 8192))
    if tm >= 256:
        tm = (tm // 256) * 256           # MXU-friendly (256x256 on v6e/v7x)
    else:
        tm = max(8, (tm // 8) * 8)
    if n_rows8 <= tm:
        if n_rows8 >= 4 * 1024:
            # Plenty of rows: expose >=4 tiles so both v7x TCs get pipelined work.
            tm = _round_up(pl.cdiv(n_rows8, 4), 256)
        else:
            tm = n_rows8                 # one tile; no forced split on 1-TC chips
    return tm


def rwcl_model_forward(x, enc_params, *, force_fallback=False):
    """RwCL_Model.forward(x): encoder(x) = stacked Linear layers, ReLU between."""
    N, feat_dim = x.shape
    n_layers = len(enc_params)
    d_out_last = enc_params[-1]["d_out"]
    out_pad_last = enc_params[-1]["w"].shape[1]
    out_dtype = x.dtype

    cap = _vmem_capacity_bytes()
    budget = int(cap * 0.70)             # generation-aware (128 MiB vs 64 MiB)

    x_isz = jnp.dtype(x.dtype).itemsize
    o_isz = jnp.dtype(out_dtype).itemsize

    # Resident (double-buffered) weight/bias footprint + per-row tile footprint.
    fixed = 0
    max_w = 0
    w_bytes = 0
    flops = 0
    for p in enc_params:
        kpad = _round_up(p["w"].shape[0], 16)
        npad = p["w"].shape[1]
        wisz = jnp.dtype(p["w"].dtype).itemsize
        fixed += 2 * (kpad * npad + 16 * npad) * wisz
        max_w = max(max_w, npad)
        w_bytes += (p["w"].size + p["b"].size) * wisz
        flops += 2 * N * p["w"].shape[0] * npad
    per_row = (2 * feat_dim * x_isz            # x tile (double-buffered)
               + 2 * out_pad_last * o_isz      # output tile
               + 3 * max_w * 4)                # in-kernel f32 intermediates

    fused_ok = (not force_fallback) and (fixed + 8 * per_row <= budget)

    if not fused_ok:
        # Large layers: per-layer tiled kernel with K-axis reduction grid.
        h = x
        last = n_layers - 1
        for li, p in enumerate(enc_params):
            h = _linear_tiled(h, p["w"], p["b"],
                              apply_relu=(li != last), vmem_cap=cap)
        return h[:, :d_out_last]

    tm = _pick_row_tile(N, (budget - fixed) // per_row)
    grid = (pl.cdiv(N, tm),)

    need = fixed + tm * per_row
    vmem_limit = int(max(16 << 20, min(int(cap * 0.9), need + (4 << 20))))

    in_specs = [pl.BlockSpec((tm, feat_dim), lambda i: (i, 0))]
    inputs = [x]
    for p in enc_params:
        # Whole weight / bias resident in VMEM across all row tiles.
        in_specs.append(pl.BlockSpec(p["w"].shape, lambda i: (0, 0)))
        in_specs.append(pl.BlockSpec(p["b"].shape, lambda i: (0, 0)))
        inputs += [p["w"], p["b"]]

    kernel = functools.partial(_fused_encoder_kernel, n_layers=n_layers)

    out = pl.pallas_call(
        kernel,
        out_shape=jax.ShapeDtypeStruct((N, out_pad_last), out_dtype),
        grid=grid,
        in_specs=in_specs,
        out_specs=pl.BlockSpec((tm, out_pad_last), lambda i: (i, 0)),
        compiler_params=pltpu.CompilerParams(
            dimension_semantics=("parallel",),
            vmem_limit_bytes=vmem_limit,
        ),
        cost_estimate=pl.CostEstimate(
            flops=flops,
            transcendentals=0,
            bytes_accessed=N * feat_dim * x_isz + w_bytes
                           + N * out_pad_last * o_isz,
        ),
    )(*inputs)

    return out[:N, :d_out_last]


def _reference_forward(x, raw_params):
    h = x
    last = len(raw_params) - 1
    for li, (w, b) in enumerate(raw_params):
        h = h @ w.T + b
        if li != last:
            h = jnp.maximum(h, 0.0)
    return h


if __name__ == "__main__":
    key = jax.random.PRNGKey(0)
    k_x, k_p = jax.random.split(key)

    N = 200            # node rows (propagated features)
    feat_dim = 48      # input feature dim
    enc_arch = [96, 64, 32]   # encoder arch "96-64-32"

    x = jax.random.normal(k_x, (N, feat_dim), dtype=jnp.float32)
    raw_params = init_rwcl_encoder_params(k_p, feat_dim, enc_arch)
    params = pack_encoder_params(raw_params)      # one-time relayout at init

    ref = _reference_forward(x, raw_params)

    # Fused single-kernel path (weights resident in VMEM).
    out = jax.block_until_ready(rwcl_model_forward(x, params))
    assert out.shape == (N, enc_arch[-1])
    assert jnp.allclose(out, ref, atol=1e-3, rtol=1e-3)

    # Also exercise the tiled per-layer fallback (used for VMEM-overflow layers).
    out_fb = jax.block_until_ready(rwcl_model_forward(x, params,
                                                      force_fallback=True))
    assert out_fb.shape == (N, enc_arch[-1])
    assert jnp.allclose(out_fb, ref, atol=1e-3, rtol=1e-3)

    print("KERNEL_OK")
</pallas_src>

<mosaic_0001>
module attributes {stable_mosaic.version = 11 : i64} {
  func.func @_fused_encoder_kernel(%arg0: i32, %arg1: memref<200x48xf32, #tpu.memory_space<vmem>>, %arg2: memref<48x128xf32, #tpu.memory_space<vmem>>, %arg3: memref<1x128xf32, #tpu.memory_space<vmem>>, %arg4: memref<128x128xf32, #tpu.memory_space<vmem>>, %arg5: memref<1x128xf32, #tpu.memory_space<vmem>>, %arg6: memref<128x128xf32, #tpu.memory_space<vmem>>, %arg7: memref<1x128xf32, #tpu.memory_space<vmem>>, %arg8: memref<200x128xf32, #tpu.memory_space<vmem>>) attributes {dimension_semantics = [#tpu.dimension_semantics<parallel>], iteration_bounds = array<i64: 1>, scalar_prefetch = 0 : i64, scratch_operands = 0 : i64, tpu.core_type = #tpu.core_type<tc>, window_params = [{transform_indices = @transform_0, window_bounds = array<i64: 200, 48>}, {pipeline_mode = #tpu.pipeline_mode<synchronous>, transform_indices = @transform_1, window_bounds = array<i64: 48, 128>}, {pipeline_mode = #tpu.pipeline_mode<synchronous>, transform_indices = @transform_2, window_bounds = array<i64: 1, 128>}, {pipeline_mode = #tpu.pipeline_mode<synchronous>, transform_indices = @transform_3, window_bounds = array<i64: 128, 128>}, {pipeline_mode = #tpu.pipeline_mode<synchronous>, transform_indices = @transform_4, window_bounds = array<i64: 1, 128>}, {pipeline_mode = #tpu.pipeline_mode<synchronous>, transform_indices = @transform_5, window_bounds = array<i64: 128, 128>}, {pipeline_mode = #tpu.pipeline_mode<synchronous>, transform_indices = @transform_6, window_bounds = array<i64: 1, 128>}, {transform_indices = @transform_7, window_bounds = array<i64: 200, 128>}]} {
    %c0 = arith.constant 0 : index
    %c0_0 = arith.constant 0 : index
    %0 = vector.load %arg1[%c0, %c0_0] : memref<200x48xf32, #tpu.memory_space<vmem>>, vector<200x48xf32>
    %c0_1 = arith.constant 0 : index
    %c0_2 = arith.constant 0 : index
    %1 = vector.load %arg2[%c0_1, %c0_2] : memref<48x128xf32, #tpu.memory_space<vmem>>, vector<48x128xf32>
    %cst = arith.constant dense<0.000000e+00> : vector<200x128xf32>
    %2 = tpu.matmul %0, %1, %cst {dimension_numbers = #tpu.dot_dimension_numbers<[1], [0], [0], [1], [0, 0, 1, 1], [], []>} : vector<200x48xf32>, vector<48x128xf32>, vector<200x128xf32> -> vector<200x128xf32>
    %c0_3 = arith.constant 0 : index
    %c0_4 = arith.constant 0 : index
    %3 = vector.load %arg3[%c0_3, %c0_4] : memref<1x128xf32, #tpu.memory_space<vmem>>, vector<1x128xf32>
    %4 = vector.broadcast %3 : vector<1x128xf32> to vector<200x128xf32>
    %5 = arith.addf %2, %4 : vector<200x128xf32>
    %cst_5 = arith.constant 0.000000e+00 : f32
    %6 = vector.broadcast %cst_5 : f32 to vector<200x128xf32>
    %7 = arith.maximumf %5, %6 : vector<200x128xf32>
    %c0_6 = arith.constant 0 : index
    %c0_7 = arith.constant 0 : index
    %8 = vector.load %arg4[%c0_6, %c0_7] : memref<128x128xf32, #tpu.memory_space<vmem>>, vector<128x128xf32>
    %cst_8 = arith.constant dense<0.000000e+00> : vector<200x128xf32>
    %9 = tpu.matmul %7, %8, %cst_8 {dimension_numbers = #tpu.dot_dimension_numbers<[1], [0], [0], [1], [0, 0, 1, 1], [], []>} : vector<200x128xf32>, vector<128x128xf32>, vector<200x128xf32> -> vector<200x128xf32>
    %c0_9 = arith.constant 0 : index
    %c0_10 = arith.constant 0 : index
    %10 = vector.load %arg5[%c0_9, %c0_10] : memref<1x128xf32, #tpu.memory_space<vmem>>, vector<1x128xf32>
    %11 = vector.broadcast %10 : vector<1x128xf32> to vector<200x128xf32>
    %12 = arith.addf %9, %11 : vector<200x128xf32>
    %cst_11 = arith.constant 0.000000e+00 : f32
    %13 = vector.broadcast %cst_11 : f32 to vector<200x128xf32>
    %14 = arith.maximumf %12, %13 : vector<200x128xf32>
    %c0_12 = arith.constant 0 : index
    %c0_13 = arith.constant 0 : index
    %15 = vector.load %arg6[%c0_12, %c0_13] : memref<128x128xf32, #tpu.memory_space<vmem>>, vector<128x128xf32>
    %cst_14 = arith.constant dense<0.000000e+00> : vector<200x128xf32>
    %16 = tpu.matmul %14, %15, %cst_14 {dimension_numbers = #tpu.dot_dimension_numbers<[1], [0], [0], [1], [0, 0, 1, 1], [], []>} : vector<200x128xf32>, vector<128x128xf32>, vector<200x128xf32> -> vector<200x128xf32>
    %c0_15 = arith.constant 0 : index
    %c0_16 = arith.constant 0 : index
    %17 = vector.load %arg7[%c0_15, %c0_16] : memref<1x128xf32, #tpu.memory_space<vmem>>, vector<1x128xf32>
    %18 = vector.broadcast %17 : vector<1x128xf32> to vector<200x128xf32>
    %19 = arith.addf %16, %18 : vector<200x128xf32>
    %c0_17 = arith.constant 0 : index
    %c0_18 = arith.constant 0 : index
    %20 = vector.load %arg8[%c0_17, %c0_18] : memref<200x128xf32, #tpu.memory_space<vmem>>, vector<200x128xf32>
    tpu.vector_store %arg8[%c0_17, %c0_18], %19 {strides = array<i32>} : memref<200x128xf32, #tpu.memory_space<vmem>>, vector<200x128xf32>,
    return
  }
  func.func @transform_0(%arg0: i32) -> (i32, i32) {
    %c0_i32 = arith.constant 0 : i32
    %c0_i32_0 = arith.constant 0 : i32
    return %arg0, %c0_i32 : i32, i32
  }
  func.func @transform_1(%arg0: i32) -> (i32, i32) {
    %c0_i32 = arith.constant 0 : i32
    %c0_i32_0 = arith.constant 0 : i32
    %c0_i32_1 = arith.constant 0 : i32
    return %c0_i32, %c0_i32_0 : i32, i32
  }
  func.func @transform_2(%arg0: i32) -> (i32, i32) {
    %c0_i32 = arith.constant 0 : i32
    %c0_i32_0 = arith.constant 0 : i32
    %c0_i32_1 = arith.constant 0 : i32
    return %c0_i32, %c0_i32_0 : i32, i32
  }
  func.func @transform_3(%arg0: i32) -> (i32, i32) {
    %c0_i32 = arith.constant 0 : i32
    %c0_i32_0 = arith.constant 0 : i32
    %c0_i32_1 = arith.constant 0 : i32
    return %c0_i32, %c0_i32_0 : i32, i32
  }
  func.func @transform_4(%arg0: i32) -> (i32, i32) {
    %c0_i32 = arith.constant 0 : i32
    %c0_i32_0 = arith.constant 0 : i32
    %c0_i32_1 = arith.constant 0 : i32
    return %c0_i32, %c0_i32_0 : i32, i32
  }
  func.func @transform_5(%arg0: i32) -> (i32, i32) {
    %c0_i32 = arith.constant 0 : i32
    %c0_i32_0 = arith.constant 0 : i32
    %c0_i32_1 = arith.constant 0 : i32
    return %c0_i32, %c0_i32_0 : i32, i32
  }
  func.func @transform_6(%arg0: i32) -> (i32, i32) {
    %c0_i32 = arith.constant 0 : i32
    %c0_i32_0 = arith.constant 0 : i32
    %c0_i32_1 = arith.constant 0 : i32
    return %c0_i32, %c0_i32_0 : i32, i32
  }
  func.func @transform_7(%arg0: i32) -> (i32, i32) {
    %c0_i32 = arith.constant 0 : i32
    %c0_i32_0 = arith.constant 0 : i32
    return %arg0, %c0_i32 : i32, i32
  }
}

</mosaic_0001>

<llo_original>
// kernel: tpu_custom_call.1
$region0: #{tpu_custom_call.1}
  #allocation0 [shape = 'u32[]', space=smem, size = 0x4, offset = 0x4, fixed_abs, tag = 'smem constant byte address 0x4 - core index']
  #allocation1 [shape = 'u32[144,128]{1,0:T(1,128)}', space=vmem, size = 0x12000, scoped, tag = 'internal scratch']
  %s0 = inlined_call_operand.vmem [shape: f32[200,48], index: 0, kind: input, shape index: {}]
  %s1 = inlined_call_operand.hbm [shape: f32[48,128], index: 1, kind: input, shape index: {}]
  %s2 = inlined_call_operand.vmem [shape: f32[1,128], index: 2, kind: input, shape index: {}]
  %s3 = inlined_call_operand.vmem [shape: f32[128,128], index: 3, kind: input, shape index: {}]
  %s4 = inlined_call_operand.vmem [shape: f32[1,128], index: 4, kind: input, shape index: {}]
  %s5 = inlined_call_operand.vmem [shape: f32[128,128], index: 5, kind: input, shape index: {}]
  %s6 = inlined_call_operand.vmem [shape: f32[1,128], index: 6, kind: input, shape index: {}]
  %s7 = inlined_call_operand.hbm [shape: f32[200,128], index: 7, kind: output, shape index: {}]
  %s8 = sld [smem:[#allocation0]]
  $region42: #{tpu_custom_call.1} parent=0
    _
  %s10 = ssub.s32 1, %s8
  %s11 = scalar_select 0, %s10, %s8
  $region1: #{tpu_custom_call.1} parent=0
    #allocation2 [shape = 'u8[24576]{0}', space=vmem, size = 0x6000, scoped, tag = 'input window, operand 1, single buffered']
    #allocation3 [shape = 's32[1]{0}', space=sflag, size = 0x4, scoped, tag = 'scoped memory for tpu_custom_call.1']
    #allocation4 [shape = 's32[1]{0}', space=sflag, size = 0x4, scoped, tag = 'scoped memory for tpu_custom_call.1']
    #allocation5 [shape = 'u8[102400]{0}', space=vmem, size = 0x19000, scoped, tag = 'output window, operand 0, single buffered']
    %12 = vsyncpa [#allocation3], 0
    %13 = vsyncpa [#allocation4], 0
    // Predicated region
    $region2: #{tpu_custom_call.1} parent=1 // pred_check
      _
    $region3: #{tpu_custom_call.1} parent=1 // pred_check_branch
      %15 = sbr.rel (0) target = $region5
    $region4: #{tpu_custom_call.1} parent=1 // pred_region
      _
    $region5: #{tpu_custom_call.1} parent=1 // pred_fallthru
      _
    // Predicated region
    $region6: #{tpu_custom_call.1} parent=1 // pred_check
      _
    $region7: #{tpu_custom_call.1} parent=1 // pred_check_branch
      %17 = sbr.rel (0) target = $region9
    $region8: #{tpu_custom_call.1} parent=1 // pred_region
      %s19 = ssub.s32 768, 768
      %20 = vsyncadd [#allocation3], %s19
      %s21 = sshll.u32 [#allocation2], 4
      %s22 = int_to_ptr.vmem [resolvable:$true] %s21
      %27 = dma.hbm_to_vmem [thread:$0]  %s1, 768, %s22, [#allocation3], 128, 128, 8
    $region9: #{tpu_custom_call.1} parent=1 // pred_fallthru
      _
    // Predicated region
    $region10: #{tpu_custom_call.1} parent=1 // pred_check
      _
    $region11: #{tpu_custom_call.1} parent=1 // pred_check_branch
      %29 = sbr.rel (0) target = $region13
    $region12: #{tpu_custom_call.1} parent=1 // pred_region
      _
    $region13: #{tpu_custom_call.1} parent=1 // pred_fallthru
      _
    // Predicated region
    $region14: #{tpu_custom_call.1} parent=1 // pred_check
      _
    $region15: #{tpu_custom_call.1} parent=1 // pred_check_branch
      %31 = sbr.rel (0) target = $region17
    $region16: #{tpu_custom_call.1} parent=1 // pred_region
      _
    $region17: #{tpu_custom_call.1} parent=1 // pred_fallthru
      _
    // Predicated region
    $region18: #{tpu_custom_call.1} parent=1 // pred_check
      _
    $region19: #{tpu_custom_call.1} parent=1 // pred_check_branch
      %33 = sbr.rel (0) target = $region21
    $region20: #{tpu_custom_call.1} parent=1 // pred_region
      _
    $region21: #{tpu_custom_call.1} parent=1 // pred_fallthru
      _
    // Predicated region
    $region22: #{tpu_custom_call.1} parent=1 // pred_check
      _
    $region23: #{tpu_custom_call.1} parent=1 // pred_check_branch
      %35 = sbr.rel (0) target = $region25
    $region24: #{tpu_custom_call.1} parent=1 // pred_region
      _
    $region25: #{tpu_custom_call.1} parent=1 // pred_fallthru
      _
    // Predicated region
    $region26: #{tpu_custom_call.1} parent=1 // pred_check
      _
    $region27: #{tpu_custom_call.1} parent=1 // pred_check_branch
      %37 = sbr.rel (0) target = $region29
    $region28: #{tpu_custom_call.1} parent=1 // pred_region
      _
    $region29: #{tpu_custom_call.1} parent=1 // pred_fallthru
      _
    // Predicated region
    $region30: #{tpu_custom_call.1} parent=1 // pred_check
      _
    $region31: #{tpu_custom_call.1} parent=1 // pred_check_branch
      %39 = sbr.rel (0) target = $region33
    $region32: #{tpu_custom_call.1} parent=1 // pred_region
      %40 = dma.done [#allocation3], 768
    $region33: #{tpu_custom_call.1} parent=1 // pred_fallthru
      _
    %v41 = vld [vmem:[%s0] sm:$0xff]
    %v42 = vld [vmem:[%s0 + $0x8] sm:$0xff]
    %v43 = vld [vmem:[%s0 + $0x10] sm:$0xff]
    %v44 = vld [vmem:[%s0 + $0x18] sm:$0xff]
    %v45 = vld [vmem:[%s0 + $0x20] sm:$0xff]
    %v46 = vld [vmem:[%s0 + $0x28] sm:$0xff]
    %v47 = vld [vmem:[%s0 + $0x30] sm:$0xff]
    %v48 = vld [vmem:[%s0 + $0x38] sm:$0xff]
    %v49 = vld [vmem:[%s0 + $0x40] sm:$0xff]
    %v50 = vld [vmem:[%s0 + $0x48] sm:$0xff]
    %v51 = vld [vmem:[%s0 + $0x50] sm:$0xff]
    %v52 = vld [vmem:[%s0 + $0x58] sm:$0xff]
    %v53 = vld [vmem:[%s0 + $0x60] sm:$0xff]
    %v54 = vld [vmem:[%s0 + $0x68] sm:$0xff]
    %v55 = vld [vmem:[%s0 + $0x70] sm:$0xff]
    %v56 = vld [vmem:[%s0 + $0x78] sm:$0xff]
    %v57 = vld [vmem:[%s0 + $0x80] sm:$0xff]
    %v58 = vld [vmem:[%s0 + $0x88] sm:$0xff]
    %v59 = vld [vmem:[%s0 + $0x90] sm:$0xff]
    %v60 = vld [vmem:[%s0 + $0x98] sm:$0xff]
    %v61 = vld [vmem:[%s0 + $0xa0] sm:$0xff]
    %v62 = vld [vmem:[%s0 + $0xa8] sm:$0xff]
    %v63 = vld [vmem:[%s0 + $0xb0] sm:$0xff]
    %v64 = vld [vmem:[%s0 + $0xb8] sm:$0xff]
    %v65 = vld [vmem:[%s0 + $0xc0] sm:$0xff]
    %v66 = vld [vmem:[#allocation2] sm:$0xff]
    %v67 = vld [vmem:[#allocation2 + $0x8] sm:$0xff]
    %v68 = vld [vmem:[#allocation2 + $0x10] sm:$0xff]
    %v69 = vld [vmem:[#allocation2 + $0x18] sm:$0xff]
    %v70 = vld [vmem:[#allocation2 + $0x20] sm:$0xff]
    %v71 = vld [vmem:[#allocation2 + $0x28] sm:$0xff]
    %v72 = vld [vmem:[%s2] sm:$0x1]
    %v74 = vlaneseq
    %v75 = vshrl.u32 %v74, 7
    %v76 = vsub.s32 0, %v75
    %v77 = vrot.slane %v72, %v76
    %vm79 = vcmask 392192
    %v81 = vsel %vm79, %v41, 0
    %v84 = vsel %vm79, %v42, 0
    %v87 = vsel %vm79, %v43, 0
    %v90 = vsel %vm79, %v44, 0
    %v93 = vsel %vm79, %v45, 0
    %v96 = vsel %vm79, %v46, 0
    %v99 = vsel %vm79, %v47, 0
    %v102 = vsel %vm79, %v48, 0
    %v105 = vsel %vm79, %v49, 0
    %v108 = vsel %vm79, %v50, 0
    %v111 = vsel %vm79, %v51, 0
    %v114 = vsel %vm79, %v52, 0
    %v117 = vsel %vm79, %v53, 0
    %v120 = vsel %vm79, %v54, 0
    %v123 = vsel %vm79, %v55, 0
    %v126 = vsel %vm79, %v56, 0
    %v129 = vsel %vm79, %v57, 0
    %v132 = vsel %vm79, %v58, 0
    %v135 = vsel %vm79, %v59, 0
    %v138 = vsel %vm79, %v60, 0
    %v141 = vsel %vm79, %v61, 0
    %v144 = vsel %vm79, %v62, 0
    %v147 = vsel %vm79, %v63, 0
    %v150 = vsel %vm79, %v64, 0
    %v153 = vsel %vm79, %v65, 0
    %155 = vmatprep.subr.mxu0 0.0
    %156 = vmatpush1.msra.mxu0 0.0
    %157 = vmatprep.subr.mxu0 0.0
    %158 = vmatpush1.msra.mxu0 0.0
    %159 = vmatprep.subr.mxu0 0.0
    %160 = vmatpush1.msra.mxu0 0.0
    %161 = vmatprep.subr.mxu0 0.0
    %162 = vmatpush1.msra.mxu0 0.0
    %163 = vmatprep.subr.mxu0 0.0
    %164 = vmatpush1.msra.mxu0 0.0
    %165 = vmatprep.subr.mxu0 0.0
    %166 = vmatpush1.msra.mxu0 0.0
    %167 = vmatprep.subr.mxu0 0.0
    %168 = vmatpush1.msra.mxu0 0.0
    %169 = vmatprep.subr.mxu0 0.0
    %170 = vmatpush1.msra.mxu0 0.0
    %171 = vmatprep.subr.mxu0 0.0
    %172 = vmatpush1.msra.mxu0 0.0
    %173 = vmatprep.subr.mxu0 0.0
    %174 = vmatpush1.msra.mxu0 0.0
    %175 = vmatprep.subr.mxu0 0.0
    %176 = vmatpush1.msra.mxu0 %v71
    %177 = vmatprep.subr.mxu0 0.0
    %178 = vmatpush1.msra.mxu0 %v70
    %179 = vmatprep.subr.mxu0 0.0
    %180 = vmatpush1.msra.mxu0 %v69
    %181 = vmatprep.subr.mxu0 0.0
    %182 = vmatpush1.msra.mxu0 %v68
    %183 = vmatprep.subr.mxu0 0.0
    %184 = vmatpush1.msra.mxu0 %v67
    %185 = vmatprep.subr.mxu0 0.0
    %186 = vmatpush1.msra.mxu0 %v66
    %187 = vmatprep.subr.mxu0 0.0
    %188 = vmatpush2.msra.mxu0 0.0
    %189 = vmatprep.subr.mxu0 0.0
    %190 = vmatpush2.msra.mxu0 0.0
    %191 = vmatprep.subr.mxu0 0.0
    %192 = vmatpush2.msra.mxu0 0.0
    %193 = vmatprep.subr.mxu0 0.0
    %194 = vmatpush2.msra.mxu0 0.0
    %195 = vmatprep.subr.mxu0 0.0
    %196 = vmatpush2.msra.mxu0 0.0
    %197 = vmatprep.subr.mxu0 0.0
    %198 = vmatpush2.msra.mxu0 0.0
    %199 = vmatprep.subr.mxu0 0.0
    %200 = vmatpush2.msra.mxu0 0.0
    %201 = vmatprep.subr.mxu0 0.0
    %202 = vmatpush2.msra.mxu0 0.0
    %203 = vmatprep.subr.mxu0 0.0
    %204 = vmatpush2.msra.mxu0 0.0
    %205 = vmatprep.subr.mxu0 0.0
    %206 = vmatpush2.msra.mxu0 0.0
    %207 = vmatprep.subr.mxu0 0.0
    %208 = vmatpush2.msra.mxu0 0.0
    %209 = vmatprep.subr.mxu0 0.0
    %210 = vmatpush2.msra.mxu0 0.0
    %211 = vmatprep.subr.mxu0 0.0
    %212 = vmatpush2.msra.mxu0 0.0
    %213 = vmatprep.subr.mxu0 0.0
    %214 = vmatpush2.msra.mxu0 0.0
    %215 = vmatprep.subr.mxu0 0.0
    %216 = vmatpush2.msra.mxu0 0.0
    %217 = vmatprep.subr.mxu0 0.0
    %218 = vmatpush2.msra.mxu0 0.0
    %219 = vmatprep.mubr.f32.mxu0 0.0
    %220 = vmatmul.mubr.f32.gmra.mxu0 %v81
    %v221 = vpop.f32.mrf.mxu0
    %v222 = vadd.f32 %v77, %v221
    %v223 = vpop.f32.mrf.mxu0
    %224 = vmatprep.mubr.f32.mxu0 0.0
    %225 = vmatmul.mubr.f32.gmra.mxu0 %v84
    %v226 = vpop.f32.mrf.mxu0
    %v227 = vadd.f32 %v77, %v226
    %v228 = vpop.f32.mrf.mxu0
    %229 = vmatprep.mubr.f32.mxu0 0.0
    %230 = vmatmul.mubr.f32.gmra.mxu0 %v87
    %v231 = vpop.f32.mrf.mxu0
    %v232 = vadd.f32 %v77, %v231
    %v233 = vpop.f32.mrf.mxu0
    %234 = vmatprep.mubr.f32.mxu0 0.0
    %235 = vmatmul.mubr.f32.gmra.mxu0 %v90
    %v236 = vpop.f32.mrf.mxu0
    %v237 = vadd.f32 %v77, %v236
    %v238 = vpop.f32.mrf.mxu0
    %239 = vmatprep.mubr.f32.mxu0 0.0
    %240 = vmatmul.mubr.f32.gmra.mxu0 %v93
    %v241 = vpop.f32.mrf.mxu0
    %v242 = vadd.f32 %v77, %v241
    %v243 = vpop.f32.mrf.mxu0
    %244 = vmatprep.mubr.f32.mxu0 0.0
    %245 = vmatmul.mubr.f32.gmra.mxu0 %v96
    %v246 = vpop.f32.mrf.mxu0
    %v247 = vadd.f32 %v77, %v246
    %v248 = vpop.f32.mrf.mxu0
    %249 = vmatprep.mubr.f32.mxu0 0.0
    %250 = vmatmul.mubr.f32.gmra.mxu0 %v99
    %v251 = vpop.f32.mrf.mxu0
    %v252 = vadd.f32 %v77, %v251
    %v253 = vpop.f32.mrf.mxu0
    %254 = vmatprep.mubr.f32.mxu0 0.0
    %255 = vmatmul.mubr.f32.gmra.mxu0 %v102
    %v256 = vpop.f32.mrf.mxu0
    %v257 = vadd.f32 %v77, %v256
    %v258 = vpop.f32.mrf.mxu0
    %259 = vmatprep.mubr.f32.mxu0 0.0
    %260 = vmatmul.mubr.f32.gmra.mxu0 %v105
    %v261 = vpop.f32.mrf.mxu0
    %v262 = vadd.f32 %v77, %v261
    %v263 = vpop.f32.mrf.mxu0
    %264 = vmatprep.mubr.f32.mxu0 0.0
    %265 = vmatmul.mubr.f32.gmra.mxu0 %v108
    %v266 = vpop.f32.mrf.mxu0
    %v267 = vadd.f32 %v77, %v266
    %v268 = vpop.f32.mrf.mxu0
    %269 = vmatprep.mubr.f32.mxu0 0.0
    %270 = vmatmul.mubr.f32.gmra.mxu0 %v111
    %v271 = vpop.f32.mrf.mxu0
    %v272 = vadd.f32 %v77, %v271
    %v273 = vpop.f32.mrf.mxu0
    %274 = vmatprep.mubr.f32.mxu0 0.0
    %275 = vmatmul.mubr.f32.gmra.mxu0 %v114
    %v276 = vpop.f32.mrf.mxu0
    %v277 = vadd.f32 %v77, %v276
    %v278 = vpop.f32.mrf.mxu0
    %279 = vmatprep.mubr.f32.mxu0 0.0
    %280 = vmatmul.mubr.f32.gmra.mxu0 %v117
    %v281 = vpop.f32.mrf.mxu0
    %v282 = vadd.f32 %v77, %v281
    %v283 = vpop.f32.mrf.mxu0
    %284 = vmatprep.mubr.f32.mxu0 0.0
    %285 = vmatmul.mubr.f32.gmra.mxu0 %v120
    %v286 = vpop.f32.mrf.mxu0
    %v287 = vadd.f32 %v77, %v286
    %v288 = vpop.f32.mrf.mxu0
    %289 = vmatprep.mubr.f32.mxu0 0.0
    %290 = vmatmul.mubr.f32.gmra.mxu0 %v123
    %v291 = vpop.f32.mrf.mxu0
    %v292 = vadd.f32 %v77, %v291
    %v293 = vpop.f32.mrf.mxu0
    %294 = vmatprep.mubr.f32.mxu0 0.0
    %295 = vmatmul.mubr.f32.gmra.mxu0 %v126
    %v296 = vpop.f32.mrf.mxu0
    %v297 = vadd.f32 %v77, %v296
    %v298 = vpop.f32.mrf.mxu0
    %299 = vmatprep.mubr.f32.mxu0 0.0
    %300 = vmatmul.mubr.f32.gmra.mxu0 %v129
    %v301 = vpop.f32.mrf.mxu0
    %v302 = vadd.f32 %v77, %v301
    %v303 = vpop.f32.mrf.mxu0
    %304 = vmatprep.mubr.f32.mxu0 0.0
    %305 = vmatmul.mubr.f32.gmra.mxu0 %v132
    %v306 = vpop.f32.mrf.mxu0
    %v307 = vadd.f32 %v77, %v306
    %v308 = vpop.f32.mrf.mxu0
    %309 = vmatprep.mubr.f32.mxu0 0.0
    %310 = vmatmul.mubr.f32.gmra.mxu0 %v135
    %v311 = vpop.f32.mrf.mxu0
    %v312 = vadd.f32 %v77, %v311
    %v313 = vpop.f32.mrf.mxu0
    %314 = vmatprep.mubr.f32.mxu0 0.0
    %315 = vmatmul.mubr.f32.gmra.mxu0 %v138
    %v316 = vpop.f32.mrf.mxu0
    %v317 = vadd.f32 %v77, %v316
    %v318 = vpop.f32.mrf.mxu0
    %319 = vmatprep.mubr.f32.mxu0 0.0
    %320 = vmatmul.mubr.f32.gmra.mxu0 %v141
    %v321 = vpop.f32.mrf.mxu0
    %v322 = vadd.f32 %v77, %v321
    %v323 = vpop.f32.mrf.mxu0
    %324 = vmatprep.mubr.f32.mxu0 0.0
    %325 = vmatmul.mubr.f32.gmra.mxu0 %v144
    %v326 = vpop.f32.mrf.mxu0
    %v327 = vadd.f32 %v77, %v326
    %v328 = vpop.f32.mrf.mxu0
    %329 = vmatprep.mubr.f32.mxu0 0.0
    %330 = vmatmul.mubr.f32.gmra.mxu0 %v147
    %v331 = vpop.f32.mrf.mxu0
    %v332 = vadd.f32 %v77, %v331
    %v333 = vpop.f32.mrf.mxu0
    %334 = vmatprep.mubr.f32.mxu0 0.0
    %335 = vmatmul.mubr.f32.gmra.mxu0 %v150
    %v336 = vpop.f32.mrf.mxu0
    %v337 = vadd.f32 %v77, %v336
    %v338 = vpop.f32.mrf.mxu0
    %339 = vmatprep.mubr.f32.mxu0 0.0
    %340 = vmatmul.mubr.f32.gmra.mxu0 %v153
    %v341 = vpop.f32.mrf.mxu0
    %v342 = vadd.f32 %v77, %v341
    %v343 = vpop.f32.mrf.mxu0
    %344 = vdwg.mxu0
    %v345 = vmax.f32 %v222, 0.0
    %v346 = vmax.f32 %v227, 0.0
    %v347 = vmax.f32 %v232, 0.0
    %v348 = vmax.f32 %v237, 0.0
    %v349 = vmax.f32 %v242, 0.0
    %v350 = vmax.f32 %v247, 0.0
    %v351 = vmax.f32 %v252, 0.0
    %v352 = vmax.f32 %v257, 0.0
    %v353 = vmax.f32 %v262, 0.0
    %v354 = vmax.f32 %v267, 0.0
    %v355 = vmax.f32 %v272, 0.0
    %v356 = vmax.f32 %v277, 0.0
    %v357 = vmax.f32 %v282, 0.0
    %v358 = vmax.f32 %v287, 0.0
    %v359 = vmax.f32 %v292, 0.0
    %v360 = vmax.f32 %v297, 0.0
    %v361 = vmax.f32 %v302, 0.0
    %v362 = vmax.f32 %v307, 0.0
    %v363 = vmax.f32 %v312, 0.0
    %v364 = vmax.f32 %v317, 0.0
    %v365 = vmax.f32 %v322, 0.0
    %v366 = vmax.f32 %v327, 0.0
    %v367 = vmax.f32 %v332, 0.0
    %v368 = vmax.f32 %v337, 0.0
    %v369 = vmax.f32 %v342, 0.0
    %v370 = vld [vmem:[%s3] sm:$0xff]
    %v371 = vld [vmem:[%s3 + $0x8] sm:$0xff]
    %v372 = vld [vmem:[%s3 + $0x10] sm:$0xff]
    %v373 = vld [vmem:[%s3 + $0x18] sm:$0xff]
    %v374 = vld [vmem:[%s3 + $0x20] sm:$0xff]
    %v375 = vld [vmem:[%s3 + $0x28] sm:$0xff]
    %v376 = vld [vmem:[%s3 + $0x30] sm:$0xff]
    %v377 = vld [vmem:[%s3 + $0x38] sm:$0xff]
    %v378 = vld [vmem:[%s3 + $0x40] sm:$0xff]
    %v379 = vld [vmem:[%s3 + $0x48] sm:$0xff]
    %v380 = vld [vmem:[%s3 + $0x50] sm:$0xff]
    %v381 = vld [vmem:[%s3 + $0x58] sm:$0xff]
    %v382 = vld [vmem:[%s3 + $0x60] sm:$0xff]
    %v383 = vld [vmem:[%s3 + $0x68] sm:$0xff]
    %v384 = vld [vmem:[%s3 + $0x70] sm:$0xff]
    %v385 = vld [vmem:[%s3 + $0x78] sm:$0xff]
    %v386 = vld [vmem:[%s4] sm:$0x1]
    %v388 = vlaneseq
    %v389 = vshrl.u32 %v388, 7
    %v390 = vsub.s32 0, %v389
    %v391 = vrot.slane %v386, %v390
    %393 = vmatprep.subr.mxu0 0.0
    %394 = vmatpush1.msra.mxu0 %v385
    %395 = vmatprep.subr.mxu0 0.0
    %396 = vmatpush1.msra.mxu0 %v384
    %397 = vmatprep.subr.mxu0 0.0
    %398 = vmatpush1.msra.mxu0 %v383
    %399 = vmatprep.subr.mxu0 0.0
    %400 = vmatpush1.msra.mxu0 %v382
    %401 = vmatprep.subr.mxu0 0.0
    %402 = vmatpush1.msra.mxu0 %v381
    %403 = vmatprep.subr.mxu0 0.0
    %404 = vmatpush1.msra.mxu0 %v380
    %405 = vmatprep.subr.mxu0 0.0
    %406 = vmatpush1.msra.mxu0 %v379
    %407 = vmatprep.subr.mxu0 0.0
    %408 = vmatpush1.msra.mxu0 %v378
    %409 = vmatprep.subr.mxu0 0.0
    %410 = vmatpush1.msra.mxu0 %v377
    %411 = vmatprep.subr.mxu0 0.0
    %412 = vmatpush1.msra.mxu0 %v376
    %413 = vmatprep.subr.mxu0 0.0
    %414 = vmatpush1.msra.mxu0 %v375
    %415 = vmatprep.subr.mxu0 0.0
    %416 = vmatpush1.msra.mxu0 %v374
    %417 = vmatprep.subr.mxu0 0.0
    %418 = vmatpush1.msra.mxu0 %v373
    %419 = vmatprep.subr.mxu0 0.0
    %420 = vmatpush1.msra.mxu0 %v372
    %421 = vmatprep.subr.mxu0 0.0
    %422 = vmatpush1.msra.mxu0 %v371
    %423 = vmatprep.subr.mxu0 0.0
    %424 = vmatpush1.msra.mxu0 %v370
    %425 = vmatprep.subr.mxu0 0.0
    %426 = vmatpush2.msra.mxu0 0.0
    %427 = vmatprep.subr.mxu0 0.0
    %428 = vmatpush2.msra.mxu0 0.0
    %429 = vmatprep.subr.mxu0 0.0
    %430 = vmatpush2.msra.mxu0 0.0
    %431 = vmatprep.subr.mxu0 0.0
    %432 = vmatpush2.msra.mxu0 0.0
    %433 = vmatprep.subr.mxu0 0.0
    %434 = vmatpush2.msra.mxu0 0.0
    %435 = vmatprep.subr.mxu0 0.0
    %436 = vmatpush2.msra.mxu0 0.0
    %437 = vmatprep.subr.mxu0 0.0
    %438 = vmatpush2.msra.mxu0 0.0
    %439 = vmatprep.subr.mxu0 0.0
    %440 = vmatpush2.msra.mxu0 0.0
    %441 = vmatprep.subr.mxu0 0.0
    %442 = vmatpush2.msra.mxu0 0.0
    %443 = vmatprep.subr.mxu0 0.0
    %444 = vmatpush2.msra.mxu0 0.0
    %445 = vmatprep.subr.mxu0 0.0
    %446 = vmatpush2.msra.mxu0 0.0
    %447 = vmatprep.subr.mxu0 0.0
    %448 = vmatpush2.msra.mxu0 0.0
    %449 = vmatprep.subr.mxu0 0.0
    %450 = vmatpush2.msra.mxu0 0.0
    %451 = vmatprep.subr.mxu0 0.0
    %452 = vmatpush2.msra.mxu0 0.0
    %453 = vmatprep.subr.mxu0 0.0
    %454 = vmatpush2.msra.mxu0 0.0
    %455 = vmatprep.subr.mxu0 0.0
    %456 = vmatpush2.msra.mxu0 0.0
    %457 = vmatprep.mubr.f32.mxu0 0.0
    %458 = vmatmul.mubr.f32.gmra.mxu0 %v345
    %v459 = vpop.f32.mrf.mxu0
    %v460 = vadd.f32 %v391, %v459
    %v461 = vpop.f32.mrf.mxu0
    %462 = vmatprep.mubr.f32.mxu0 0.0
    %463 = vmatmul.mubr.f32.gmra.mxu0 %v346
    %v464 = vpop.f32.mrf.mxu0
    %v465 = vadd.f32 %v391, %v464
    %v466 = vpop.f32.mrf.mxu0
    %467 = vmatprep.mubr.f32.mxu0 0.0
    %468 = vmatmul.mubr.f32.gmra.mxu0 %v347
    %v469 = vpop.f32.mrf.mxu0
    %v470 = vadd.f32 %v391, %v469
    %v471 = vpop.f32.mrf.mxu0
    %472 = vmatprep.mubr.f32.mxu0 0.0
    %473 = vmatmul.mubr.f32.gmra.mxu0 %v348
    %v474 = vpop.f32.mrf.mxu0
    %v475 = vadd.f32 %v391, %v474
    %v476 = vpop.f32.mrf.mxu0
    %477 = vmatprep.mubr.f32.mxu0 0.0
    %478 = vmatmul.mubr.f32.gmra.mxu0 %v349
    %v479 = vpop.f32.mrf.mxu0
    %v480 = vadd.f32 %v391, %v479
    %v481 = vpop.f32.mrf.mxu0
    %482 = vmatprep.mubr.f32.mxu0 0.0
    %483 = vmatmul.mubr.f32.gmra.mxu0 %v350
    %v484 = vpop.f32.mrf.mxu0
    %v485 = vadd.f32 %v391, %v484
    %v486 = vpop.f32.mrf.mxu0
    %487 = vmatprep.mubr.f32.mxu0 0.0
    %488 = vmatmul.mubr.f32.gmra.mxu0 %v351
    %v489 = vpop.f32.mrf.mxu0
    %v490 = vadd.f32 %v391, %v489
    %v491 = vpop.f32.mrf.mxu0
    %492 = vmatprep.mubr.f32.mxu0 0.0
    %493 = vmatmul.mubr.f32.gmra.mxu0 %v352
    %v494 = vpop.f32.mrf.mxu0
    %v495 = vadd.f32 %v391, %v494
    %v496 = vpop.f32.mrf.mxu0
    %497 = vmatprep.mubr.f32.mxu0 0.0
    %498 = vmatmul.mubr.f32.gmra.mxu0 %v353
    %v499 = vpop.f32.mrf.mxu0
    %v500 = vadd.f32 %v391, %v499
    %v501 = vpop.f32.mrf.mxu0
    %502 = vmatprep.mubr.f32.mxu0 0.0
    %503 = vmatmul.mubr.f32.gmra.mxu0 %v354
    %v504 = vpop.f32.mrf.mxu0
    %v505 = vadd.f32 %v391, %v504
    %v506 = vpop.f32.mrf.mxu0
    %507 = vmatprep.mubr.f32.mxu0 0.0
    %508 = vmatmul.mubr.f32.gmra.mxu0 %v355
    %v509 = vpop.f32.mrf.mxu0
    %v510 = vadd.f32 %v391, %v509
    %v511 = vpop.f32.mrf.mxu0
    %512 = vmatprep.mubr.f32.mxu0 0.0
    %513 = vmatmul.mubr.f32.gmra.mxu0 %v356
    %v514 = vpop.f32.mrf.mxu0
    %v515 = vadd.f32 %v391, %v514
    %v516 = vpop.f32.mrf.mxu0
    %517 = vmatprep.mubr.f32.mxu0 0.0
    %518 = vmatmul.mubr.f32.gmra.mxu0 %v357
    %v519 = vpop.f32.mrf.mxu0
    %v520 = vadd.f32 %v391, %v519
    %v521 = vpop.f32.mrf.mxu0
    %522 = vmatprep.mubr.f32.mxu0 0.0
    %523 = vmatmul.mubr.f32.gmra.mxu0 %v358
    %v524 = vpop.f32.mrf.mxu0
    %v525 = vadd.f32 %v391, %v524
    %v526 = vpop.f32.mrf.mxu0
    %527 = vmatprep.mubr.f32.mxu0 0.0
    %528 = vmatmul.mubr.f32.gmra.mxu0 %v359
    %v529 = vpop.f32.mrf.mxu0
    %v530 = vadd.f32 %v391, %v529
    %v531 = vpop.f32.mrf.mxu0
    %532 = vmatprep.mubr.f32.mxu0 0.0
    %533 = vmatmul.mubr.f32.gmra.mxu0 %v360
    %v534 = vpop.f32.mrf.mxu0
    %v535 = vadd.f32 %v391, %v534
    %v536 = vpop.f32.mrf.mxu0
    %537 = vmatprep.mubr.f32.mxu0 0.0
    %538 = vmatmul.mubr.f32.gmra.mxu0 %v361
    %v539 = vpop.f32.mrf.mxu0
    %v540 = vadd.f32 %v391, %v539
    %v541 = vpop.f32.mrf.mxu0
    %542 = vmatprep.mubr.f32.mxu0 0.0
    %543 = vmatmul.mubr.f32.gmra.mxu0 %v362
    %v544 = vpop.f32.mrf.mxu0
    %v545 = vadd.f32 %v391, %v544
    %v546 = vpop.f32.mrf.mxu0
    %547 = vmatprep.mubr.f32.mxu0 0.0
    %548 = vmatmul.mubr.f32.gmra.mxu0 %v363
    %v549 = vpop.f32.mrf.mxu0
    %v550 = vadd.f32 %v391, %v549
    %v551 = vpop.f32.mrf.mxu0
    %552 = vmatprep.mubr.f32.mxu0 0.0
    %553 = vmatmul.mubr.f32.gmra.mxu0 %v364
    %v554 = vpop.f32.mrf.mxu0
    %v555 = vadd.f32 %v391, %v554
    %v556 = vpop.f32.mrf.mxu0
    %557 = vmatprep.mubr.f32.mxu0 0.0
    %558 = vmatmul.mubr.f32.gmra.mxu0 %v365
    %v559 = vpop.f32.mrf.mxu0
    %v560 = vadd.f32 %v391, %v559
    %v561 = vpop.f32.mrf.mxu0
    %562 = vmatprep.mubr.f32.mxu0 0.0
    %563 = vmatmul.mubr.f32.gmra.mxu0 %v366
    %v564 = vpop.f32.mrf.mxu0
    %v565 = vadd.f32 %v391, %v564
    %v566 = vpop.f32.mrf.mxu0
    %567 = vmatprep.mubr.f32.mxu0 0.0
    %568 = vmatmul.mubr.f32.gmra.mxu0 %v367
    %v569 = vpop.f32.mrf.mxu0
    %v570 = vadd.f32 %v391, %v569
    %v571 = vpop.f32.mrf.mxu0
    %572 = vmatprep.mubr.f32.mxu0 0.0
    %573 = vmatmul.mubr.f32.gmra.mxu0 %v368
    %v574 = vpop.f32.mrf.mxu0
    %v575 = vadd.f32 %v391, %v574
    %v576 = vpop.f32.mrf.mxu0
    %577 = vmatprep.mubr.f32.mxu0 0.0
    %578 = vmatmul.mubr.f32.gmra.mxu0 %v369
    %v579 = vpop.f32.mrf.mxu0
    %v580 = vadd.f32 %v391, %v579
    %v581 = vpop.f32.mrf.mxu0
    %582 = vdwg.mxu0
    %v583 = vmax.f32 %v460, 0.0
    %v584 = vmax.f32 %v465, 0.0
    %v585 = vmax.f32 %v470, 0.0
    %v586 = vmax.f32 %v475, 0.0
    %v587 = vmax.f32 %v480, 0.0
    %v588 = vmax.f32 %v485, 0.0
    %v589 = vmax.f32 %v490, 0.0
    %v590 = vmax.f32 %v495, 0.0
    %v591 = vmax.f32 %v500, 0.0
    %v592 = vmax.f32 %v505, 0.0
    %v593 = vmax.f32 %v510, 0.0
    %v594 = vmax.f32 %v515, 0.0
    %v595 = vmax.f32 %v520, 0.0
    %v596 = vmax.f32 %v525, 0.0
    %v597 = vmax.f32 %v530, 0.0
    %v598 = vmax.f32 %v535, 0.0
    %v599 = vmax.f32 %v540, 0.0
    %v600 = vmax.f32 %v545, 0.0
    %v601 = vmax.f32 %v550, 0.0
    %v602 = vmax.f32 %v555, 0.0
    %v603 = vmax.f32 %v560, 0.0
    %v604 = vmax.f32 %v565, 0.0
    %v605 = vmax.f32 %v570, 0.0
    %v606 = vmax.f32 %v575, 0.0
    %v607 = vmax.f32 %v580, 0.0
    %v608 = vld [vmem:[%s5] sm:$0xff]
    %v609 = vld [vmem:[%s5 + $0x8] sm:$0xff]
    %v610 = vld [vmem:[%s5 + $0x10] sm:$0xff]
    %v611 = vld [vmem:[%s5 + $0x18] sm:$0xff]
    %v612 = vld [vmem:[%s5 + $0x20] sm:$0xff]
    %v613 = vld [vmem:[%s5 + $0x28] sm:$0xff]
    %v614 = vld [vmem:[%s5 + $0x30] sm:$0xff]
    %v615 = vld [vmem:[%s5 + $0x38] sm:$0xff]
    %v616 = vld [vmem:[%s5 + $0x40] sm:$0xff]
    %v617 = vld [vmem:[%s5 + $0x48] sm:$0xff]
    %v618 = vld [vmem:[%s5 + $0x50] sm:$0xff]
    %v619 = vld [vmem:[%s5 + $0x58] sm:$0xff]
    %v620 = vld [vmem:[%s5 + $0x60] sm:$0xff]
    %v621 = vld [vmem:[%s5 + $0x68] sm:$0xff]
    %v622 = vld [vmem:[%s5 + $0x70] sm:$0xff]
    %v623 = vld [vmem:[%s5 + $0x78] sm:$0xff]
    %v624 = vld [vmem:[%s6] sm:$0x1]
    %v626 = vlaneseq
    %v627 = vshrl.u32 %v626, 7
    %v628 = vsub.s32 0, %v627
    %v629 = vrot.slane %v624, %v628
    %631 = vmatprep.subr.mxu0 0.0
    %632 = vmatpush1.msra.mxu0 %v623
    %633 = vmatprep.subr.mxu0 0.0
    %634 = vmatpush1.msra.mxu0 %v622
    %635 = vmatprep.subr.mxu0 0.0
    %636 = vmatpush1.msra.mxu0 %v621
    %637 = vmatprep.subr.mxu0 0.0
    %638 = vmatpush1.msra.mxu0 %v620
    %639 = vmatprep.subr.mxu0 0.0
    %640 = vmatpush1.msra.mxu0 %v619
    %641 = vmatprep.subr.mxu0 0.0
    %642 = vmatpush1.msra.mxu0 %v618
    %643 = vmatprep.subr.mxu0 0.0
    %644 = vmatpush1.msra.mxu0 %v617
    %645 = vmatprep.subr.mxu0 0.0
    %646 = vmatpush1.msra.mxu0 %v616
    %647 = vmatprep.subr.mxu0 0.0
    %648 = vmatpush1.msra.mxu0 %v615
    %649 = vmatprep.subr.mxu0 0.0
    %650 = vmatpush1.msra.mxu0 %v614
    %651 = vmatprep.subr.mxu0 0.0
    %652 = vmatpush1.msra.mxu0 %v613
    %653 = vmatprep.subr.mxu0 0.0
    %654 = vmatpush1.msra.mxu0 %v612
    %655 = vmatprep.subr.mxu0 0.0
    %656 = vmatpush1.msra.mxu0 %v611
    %657 = vmatprep.subr.mxu0 0.0
    %658 = vmatpush1.msra.mxu0 %v610
    %659 = vmatprep.subr.mxu0 0.0
    %660 = vmatpush1.msra.mxu0 %v609
    %661 = vmatprep.subr.mxu0 0.0
    %662 = vmatpush1.msra.mxu0 %v608
    %663 = vmatprep.subr.mxu0 0.0
    %664 = vmatpush2.msra.mxu0 0.0
    %665 = vmatprep.subr.mxu0 0.0
    %666 = vmatpush2.msra.mxu0 0.0
    %667 = vmatprep.subr.mxu0 0.0
    %668 = vmatpush2.msra.mxu0 0.0
    %669 = vmatprep.subr.mxu0 0.0
    %670 = vmatpush2.msra.mxu0 0.0
    %671 = vmatprep.subr.mxu0 0.0
    %672 = vmatpush2.msra.mxu0 0.0
    %673 = vmatprep.subr.mxu0 0.0
    %674 = vmatpush2.msra.mxu0 0.0
    %675 = vmatprep.subr.mxu0 0.0
    %676 = vmatpush2.msra.mxu0 0.0
    %677 = vmatprep.subr.mxu0 0.0
    %678 = vmatpush2.msra.mxu0 0.0
    %679 = vmatprep.subr.mxu0 0.0
    %680 = vmatpush2.msra.mxu0 0.0
    %681 = vmatprep.subr.mxu0 0.0
    %682 = vmatpush2.msra.mxu0 0.0
    %683 = vmatprep.subr.mxu0 0.0
    %684 = vmatpush2.msra.mxu0 0.0
    %685 = vmatprep.subr.mxu0 0.0
    %686 = vmatpush2.msra.mxu0 0.0
    %687 = vmatprep.subr.mxu0 0.0
    %688 = vmatpush2.msra.mxu0 0.0
    %689 = vmatprep.subr.mxu0 0.0
    %690 = vmatpush2.msra.mxu0 0.0
    %691 = vmatprep.subr.mxu0 0.0
    %692 = vmatpush2.msra.mxu0 0.0
    %693 = vmatprep.subr.mxu0 0.0
    %694 = vmatpush2.msra.mxu0 0.0
    %695 = vmatprep.mubr.f32.mxu0 0.0
    %696 = vmatmul.mubr.f32.gmra.mxu0 %v583
    %v697 = vpop.f32.mrf.mxu0
    %v698 = vadd.f32 %v629, %v697
    %v699 = vpop.f32.mrf.mxu0
    %700 = vmatprep.mubr.f32.mxu0 0.0
    %701 = vmatmul.mubr.f32.gmra.mxu0 %v584
    %v702 = vpop.f32.mrf.mxu0
    %v703 = vadd.f32 %v629, %v702
    %v704 = vpop.f32.mrf.mxu0
    %705 = vmatprep.mubr.f32.mxu0 0.0
    %706 = vmatmul.mubr.f32.gmra.mxu0 %v585
    %v707 = vpop.f32.mrf.mxu0
    %v708 = vadd.f32 %v629, %v707
    %v709 = vpop.f32.mrf.mxu0
    %710 = vmatprep.mubr.f32.mxu0 0.0
    %711 = vmatmul.mubr.f32.gmra.mxu0 %v586
    %v712 = vpop.f32.mrf.mxu0
    %v713 = vadd.f32 %v629, %v712
    %v714 = vpop.f32.mrf.mxu0
    %715 = vmatprep.mubr.f32.mxu0 0.0
    %716 = vmatmul.mubr.f32.gmra.mxu0 %v587
    %v717 = vpop.f32.mrf.mxu0
    %v718 = vadd.f32 %v629, %v717
    %v719 = vpop.f32.mrf.mxu0
    %720 = vmatprep.mubr.f32.mxu0 0.0
    %721 = vmatmul.mubr.f32.gmra.mxu0 %v588
    %v722 = vpop.f32.mrf.mxu0
    %v723 = vadd.f32 %v629, %v722
    %v724 = vpop.f32.mrf.mxu0
    %725 = vmatprep.mubr.f32.mxu0 0.0
    %726 = vmatmul.mubr.f32.gmra.mxu0 %v589
    %v727 = vpop.f32.mrf.mxu0
    %v728 = vadd.f32 %v629, %v727
    %v729 = vpop.f32.mrf.mxu0
    %730 = vmatprep.mubr.f32.mxu0 0.0
    %731 = vmatmul.mubr.f32.gmra.mxu0 %v590
    %v732 = vpop.f32.mrf.mxu0
    %v733 = vadd.f32 %v629, %v732
    %v734 = vpop.f32.mrf.mxu0
    %735 = vmatprep.mubr.f32.mxu0 0.0
    %736 = vmatmul.mubr.f32.gmra.mxu0 %v591
    %v737 = vpop.f32.mrf.mxu0
    %v738 = vadd.f32 %v629, %v737
    %v739 = vpop.f32.mrf.mxu0
    %740 = vmatprep.mubr.f32.mxu0 0.0
    %741 = vmatmul.mubr.f32.gmra.mxu0 %v592
    %v742 = vpop.f32.mrf.mxu0
    %v743 = vadd.f32 %v629, %v742
    %v744 = vpop.f32.mrf.mxu0
    %745 = vmatprep.mubr.f32.mxu0 0.0
    %746 = vmatmul.mubr.f32.gmra.mxu0 %v593
    %v747 = vpop.f32.mrf.mxu0
    %v748 = vadd.f32 %v629, %v747
    %v749 = vpop.f32.mrf.mxu0
    %750 = vmatprep.mubr.f32.mxu0 0.0
    %751 = vmatmul.mubr.f32.gmra.mxu0 %v594
    %v752 = vpop.f32.mrf.mxu0
    %v753 = vadd.f32 %v629, %v752
    %v754 = vpop.f32.mrf.mxu0
    %755 = vmatprep.mubr.f32.mxu0 0.0
    %756 = vmatmul.mubr.f32.gmra.mxu0 %v595
    %v757 = vpop.f32.mrf.mxu0
    %v758 = vadd.f32 %v629, %v757
    %v759 = vpop.f32.mrf.mxu0
    %760 = vmatprep.mubr.f32.mxu0 0.0
    %761 = vmatmul.mubr.f32.gmra.mxu0 %v596
    %v762 = vpop.f32.mrf.mxu0
    %v763 = vadd.f32 %v629, %v762
    %v764 = vpop.f32.mrf.mxu0
    %765 = vmatprep.mubr.f32.mxu0 0.0
    %766 = vmatmul.mubr.f32.gmra.mxu0 %v597
    %v767 = vpop.f32.mrf.mxu0
    %v768 = vadd.f32 %v629, %v767
    %v769 = vpop.f32.mrf.mxu0
    %770 = vmatprep.mubr.f32.mxu0 0.0
    %771 = vmatmul.mubr.f32.gmra.mxu0 %v598
    %v772 = vpop.f32.mrf.mxu0
    %v773 = vadd.f32 %v629, %v772
    %v774 = vpop.f32.mrf.mxu0
    %775 = vmatprep.mubr.f32.mxu0 0.0
    %776 = vmatmul.mubr.f32.gmra.mxu0 %v599
    %v777 = vpop.f32.mrf.mxu0
    %v778 = vadd.f32 %v629, %v777
    %v779 = vpop.f32.mrf.mxu0
    %780 = vmatprep.mubr.f32.mxu0 0.0
    %781 = vmatmul.mubr.f32.gmra.mxu0 %v600
    %v782 = vpop.f32.mrf.mxu0
    %v783 = vadd.f32 %v629, %v782
    %v784 = vpop.f32.mrf.mxu0
    %785 = vmatprep.mubr.f32.mxu0 0.0
    %786 = vmatmul.mubr.f32.gmra.mxu0 %v601
    %v787 = vpop.f32.mrf.mxu0
    %v788 = vadd.f32 %v629, %v787
    %v789 = vpop.f32.mrf.mxu0
    %790 = vmatprep.mubr.f32.mxu0 0.0
    %791 = vmatmul.mubr.f32.gmra.mxu0 %v602
    %v792 = vpop.f32.mrf.mxu0
    %v793 = vadd.f32 %v629, %v792
    %v794 = vpop.f32.mrf.mxu0
    %795 = vmatprep.mubr.f32.mxu0 0.0
    %796 = vmatmul.mubr.f32.gmra.mxu0 %v603
    %v797 = vpop.f32.mrf.mxu0
    %v798 = vadd.f32 %v629, %v797
    %v799 = vpop.f32.mrf.mxu0
    %800 = vmatprep.mubr.f32.mxu0 0.0
    %801 = vmatmul.mubr.f32.gmra.mxu0 %v604
    %v802 = vpop.f32.mrf.mxu0
    %v803 = vadd.f32 %v629, %v802
    %v804 = vpop.f32.mrf.mxu0
    %805 = vmatprep.mubr.f32.mxu0 0.0
    %806 = vmatmul.mubr.f32.gmra.mxu0 %v605
    %v807 = vpop.f32.mrf.mxu0
    %v808 = vadd.f32 %v629, %v807
    %v809 = vpop.f32.mrf.mxu0
    %810 = vmatprep.mubr.f32.mxu0 0.0
    %811 = vmatmul.mubr.f32.gmra.mxu0 %v606
    %v812 = vpop.f32.mrf.mxu0
    %v813 = vadd.f32 %v629, %v812
    %v814 = vpop.f32.mrf.mxu0
    %815 = vmatprep.mubr.f32.mxu0 0.0
    %816 = vmatmul.mubr.f32.gmra.mxu0 %v607
    %v817 = vpop.f32.mrf.mxu0
    %v818 = vadd.f32 %v629, %v817
    %v819 = vpop.f32.mrf.mxu0
    %820 = vdwg.mxu0
    %821 = vst [vmem:[#allocation5] sm:$0xff] %v698
    %822 = vst [vmem:[#allocation5 + $0x8] sm:$0xff] %v703
    %823 = vst [vmem:[#allocation5 + $0x10] sm:$0xff] %v708
    %824 = vst [vmem:[#allocation5 + $0x18] sm:$0xff] %v713
    %825 = vst [vmem:[#allocation5 + $0x20] sm:$0xff] %v718
    %826 = vst [vmem:[#allocation5 + $0x28] sm:$0xff] %v723
    %827 = vst [vmem:[#allocation5 + $0x30] sm:$0xff] %v728
    %828 = vst [vmem:[#allocation5 + $0x38] sm:$0xff] %v733
    %829 = vst [vmem:[#allocation5 + $0x40] sm:$0xff] %v738
    %830 = vst [vmem:[#allocation5 + $0x48] sm:$0xff] %v743
    %831 = vst [vmem:[#allocation5 + $0x50] sm:$0xff] %v748
    %832 = vst [vmem:[#allocation5 + $0x58] sm:$0xff] %v753
    %833 = vst [vmem:[#allocation5 + $0x60] sm:$0xff] %v758
    %834 = vst [vmem:[#allocation5 + $0x68] sm:$0xff] %v763
    %835 = vst [vmem:[#allocation5 + $0x70] sm:$0xff] %v768
    %836 = vst [vmem:[#allocation5 + $0x78] sm:$0xff] %v773
    %837 = vst [vmem:[#allocation5 + $0x80] sm:$0xff] %v778
    %838 = vst [vmem:[#allocation5 + $0x88] sm:$0xff] %v783
    %839 = vst [vmem:[#allocation5 + $0x90] sm:$0xff] %v788
    %840 = vst [vmem:[#allocation5 + $0x98] sm:$0xff] %v793
    %841 = vst [vmem:[#allocation5 + $0xa0] sm:$0xff] %v798
    %842 = vst [vmem:[#allocation5 + $0xa8] sm:$0xff] %v803
    %843 = vst [vmem:[#allocation5 + $0xb0] sm:$0xff] %v808
    %844 = vst [vmem:[#allocation5 + $0xb8] sm:$0xff] %v813
    %845 = vst [vmem:[#allocation5 + $0xc0] sm:$0xff] %v818
    // Predicated region
    $region34: #{tpu_custom_call.1} parent=1 // pred_check
      _
    $region35: #{tpu_custom_call.1} parent=1 // pred_check_branch
      %847 = sbr.rel (0) target = $region37
    $region36: #{tpu_custom_call.1} parent=1 // pred_region
      %s849 = ssub.s32 3200, 3200
      %850 = vsyncadd [#allocation4], %s849
      %s851 = sshll.u32 [#allocation5], 4
      %s852 = int_to_ptr.vmem [resolvable:$true] %s851
      %857 = dma.vmem_to_hbm [thread:$0]  %s852, 3200, %s7, [#allocation4], 128, 128, 8
    $region37: #{tpu_custom_call.1} parent=1 // pred_fallthru
      _
    // Predicated region
    $region38: #{tpu_custom_call.1} parent=1 // pred_check
      _
    $region39: #{tpu_custom_call.1} parent=1 // pred_check_branch
      %859 = sbr.rel (0) target = $region41
    $region40: #{tpu_custom_call.1} parent=1 // pred_region
      %860 = dma.done [#allocation4], 3200
    $region41: #{tpu_custom_call.1} parent=1 // pred_fallthru
      _
    %861 = vsyncpa [#allocation3], 1
    %862 = vsyncpa [#allocation4], 1

</llo_original>
